<compile_context>
chip_gen: v6e
topology: v6e:2x2x1
jax: 0.10.0
libtpu: 0.0.40
codegen_flags: <defaults>
</compile_context>

<pallas_src>
import jax
import jax.numpy as jnp
from jax.experimental import pallas as pl
from jax.experimental.pallas import tpu as pltpu

LANE = 128
TB_ALIGN = 16  # sublane alignment covering both f32 (8) and bf16 (16) tiles


def _round_up(n, m):
    return (n + m - 1) // m * m


def _cdiv(a, b):
    return (a + b - 1) // b


def mlp_kernel(x_ref, w1_ref, b1_ref, w2_ref, b2_ref, o_ref):
    # x: [TB, D] f32, w1: [D, Hp] bf16, b1: [1, Hp] f32,
    # w2: [Hp, Cp] bf16, b2: [1, Cp] f32, o: [TB, Cp] bf16
    # In-kernel f32->bf16 cast of x (VALU has slack; saves a wrapper HBM pass).
    x_bf = x_ref[...].astype(jnp.bfloat16)
    h = jnp.dot(x_bf, w1_ref[...], preferred_element_type=jnp.float32)
    h = jnp.maximum(h + b1_ref[...], 0.0)                      # f32 epilogue (ReLU)
    o = jnp.dot(h.astype(jnp.bfloat16), w2_ref[...],
                preferred_element_type=jnp.float32)
    o_ref[...] = (o + b2_ref[...]).astype(o_ref.dtype)         # bf16 store


def _pad_params(w1, b1, w2, b2):
    """Zero-pad hidden and class dims up to a multiple of 128 lanes."""
    D, H = w1.shape
    _, C = w2.shape
    Hp = _round_up(H, LANE)
    Cp = _round_up(C, LANE)
    w1p = jnp.pad(w1, ((0, 0), (0, Hp - H)))
    b1p = jnp.pad(b1.reshape(1, -1), ((0, 0), (0, Hp - H)))
    w2p = jnp.pad(w2, ((0, Hp - H), (0, Cp - C)))
    b2p = jnp.pad(b2.reshape(1, -1), ((0, 0), (0, Cp - C)))
    return w1p, b1p, w2p, b2p


def simple_nn_forward(x, w1, b1, w2, b2, *, block_b=4096):
    """y = relu(x @ w1 + b1) @ w2 + b2, fused in one Pallas kernel.

    x:  [B, D] f32
    w1: [D, H] f32, b1: [H] or [1, H] f32
    w2: [H, C] f32, b2: [C] or [1, C] f32
    returns [B, C] f32
    """
    B, D = x.shape
    C = w2.shape[1]

    # Lane-pad H and C to 128; padded hidden cols see zero weight + zero bias,
    # ReLU(0)=0, and padded w2 rows are zero, so results are exact.
    w1p, b1p, w2p, b2p = _pad_params(w1, b1, w2, b2)
    Hp = w1p.shape[1]
    Cp = w2p.shape[1]

    # Adaptive batch tiling:
    #   - big tiles amortize the ~0.35 us/step pipeline overhead,
    #   - >= 2 tiles for B >= 256 so v7x's two TensorCores both get work,
    #   - TB derived from B so padding is at most a few rows.
    min_tiles = 2 if B >= 256 else 1
    n_tiles = max(_cdiv(B, block_b), min_tiles)
    TB = _round_up(_cdiv(B, n_tiles), TB_ALIGN)
    Bp = _round_up(B, TB)
    if Bp != B:
        x = jnp.pad(x, ((0, Bp - B), (0, 0)))

    # Weights to bf16 once (tiny, one-time); x stays f32 (cast in-kernel).
    w1_bf = w1p.astype(jnp.bfloat16)
    w2_bf = w2p.astype(jnp.bfloat16)

    out = pl.pallas_call(
        mlp_kernel,
        out_shape=jax.ShapeDtypeStruct((Bp, Cp), jnp.bfloat16),
        grid_spec=pltpu.PrefetchScalarGridSpec(
            num_scalar_prefetch=0,
            grid=(Bp // TB,),
            in_specs=[
                pl.BlockSpec((TB, D), lambda i: (i, 0)),    # x: streams over batch (f32)
                pl.BlockSpec((D, Hp), lambda i: (0, 0)),    # w1: resident (constant idx)
                pl.BlockSpec((1, Hp), lambda i: (0, 0)),    # b1: resident
                pl.BlockSpec((Hp, Cp), lambda i: (0, 0)),   # w2: resident
                pl.BlockSpec((1, Cp), lambda i: (0, 0)),    # b2: resident
            ],
            out_specs=pl.BlockSpec((TB, Cp), lambda i: (i, 0)),
        ),
        compiler_params=pltpu.CompilerParams(
            # Batch tiles are independent -> v7x's two TensorCores split them.
            dimension_semantics=("parallel",),
        ),
    )(x, w1_bf, b1p, w2_bf, b2p)

    # Slice away batch/class padding; upcast the tiny result back to f32.
    return out[:B, :C].astype(jnp.float32)


def init_params(key, input_size, num_classes, hidden=50):
    # Deterministic init mirroring nn.Linear's uniform(-1/sqrt(fan_in), 1/sqrt(fan_in)).
    k1, k2, k3, k4 = jax.random.split(key, 4)
    bound1 = 1.0 / jnp.sqrt(input_size)
    bound2 = 1.0 / jnp.sqrt(hidden)
    # Stored as [in, out] (transposed relative to PyTorch's [out, in]).
    w1 = jax.random.uniform(k1, (input_size, hidden), jnp.float32, -bound1, bound1)
    b1 = jax.random.uniform(k2, (hidden,), jnp.float32, -bound1, bound1)
    w2 = jax.random.uniform(k3, (hidden, num_classes), jnp.float32, -bound2, bound2)
    b2 = jax.random.uniform(k4, (num_classes,), jnp.float32, -bound2, bound2)
    return w1, b1, w2, b2


def _ref_bf16(x, w1, b1, w2, b2):
    # Same bf16-input / f32-accumulate recipe as the kernel (without the final
    # bf16 output rounding).
    h = jnp.dot(x.astype(jnp.bfloat16), w1.astype(jnp.bfloat16),
                preferred_element_type=jnp.float32) + b1
    h = jnp.maximum(h, 0.0)
    return jnp.dot(h.astype(jnp.bfloat16), w2.astype(jnp.bfloat16),
                   preferred_element_type=jnp.float32) + b2


if __name__ == "__main__":
    key = jax.random.PRNGKey(0)
    input_size, num_classes = 32, 10
    kx, kp = jax.random.split(key)
    w1, b1, w2, b2 = init_params(kp, input_size, num_classes)

    fwd = jax.jit(simple_nn_forward)

    # Case 1: small batch (single tile).
    x_small = jax.random.normal(kx, (8, input_size), jnp.float32)
    out_small = fwd(x_small, w1, b1, w2, b2)
    jax.block_until_ready(out_small)
    assert out_small.shape == (8, num_classes)

    # Case 2: awkward batch >= 256 (exercises >= 2 grid tiles + batch padding).
    x_big = jax.random.normal(kx, (300, input_size), jnp.float32)
    out_big = fwd(x_big, w1, b1, w2, b2)
    jax.block_until_ready(out_big)
    assert out_big.shape == (300, num_classes)

    for x_in, out in ((x_small, out_small), (x_big, out_big)):
        # Reference 1: bf16-MXU recipe (tolerance covers the bf16 output store).
        ref_b = _ref_bf16(x_in, w1, b1, w2, b2)
        assert jnp.allclose(out, ref_b, atol=3e-2, rtol=2e-2)
        # Reference 2: pure f32 forward (loose; bounds total bf16 error).
        ref_f = jnp.maximum(x_in @ w1 + b1, 0.0) @ w2 + b2
        assert jnp.allclose(out, ref_f, atol=8e-2, rtol=8e-2)

    print("KERNEL_OK")
</pallas_src>

<mosaic_0001>
module attributes {stable_mosaic.version = 11 : i64} {
  func.func @mlp_kernel(%arg0: i32, %arg1: memref<16x32xf32, #tpu.memory_space<vmem>>, %arg2: memref<32x128xbf16, #tpu.memory_space<vmem>>, %arg3: memref<1x128xf32, #tpu.memory_space<vmem>>, %arg4: memref<128x128xbf16, #tpu.memory_space<vmem>>, %arg5: memref<1x128xf32, #tpu.memory_space<vmem>>, %arg6: memref<16x128xbf16, #tpu.memory_space<vmem>>) attributes {dimension_semantics = [#tpu.dimension_semantics<parallel>], iteration_bounds = array<i64: 1>, scalar_prefetch = 0 : i64, scratch_operands = 0 : i64, tpu.core_type = #tpu.core_type<tc>, window_params = [{transform_indices = @transform_0, window_bounds = array<i64: 16, 32>}, {pipeline_mode = #tpu.pipeline_mode<synchronous>, transform_indices = @transform_1, window_bounds = array<i64: 32, 128>}, {pipeline_mode = #tpu.pipeline_mode<synchronous>, transform_indices = @transform_2, window_bounds = array<i64: 1, 128>}, {pipeline_mode = #tpu.pipeline_mode<synchronous>, transform_indices = @transform_3, window_bounds = array<i64: 128, 128>}, {pipeline_mode = #tpu.pipeline_mode<synchronous>, transform_indices = @transform_4, window_bounds = array<i64: 1, 128>}, {transform_indices = @transform_5, window_bounds = array<i64: 16, 128>}]} {
    %c0 = arith.constant 0 : index
    %c0_0 = arith.constant 0 : index
    %0 = vector.load %arg1[%c0, %c0_0] : memref<16x32xf32, #tpu.memory_space<vmem>>, vector<16x32xf32>
    %1 = arith.truncf %0 : vector<16x32xf32> to vector<16x32xbf16>
    %c0_1 = arith.constant 0 : index
    %c0_2 = arith.constant 0 : index
    %2 = vector.load %arg2[%c0_1, %c0_2] : memref<32x128xbf16, #tpu.memory_space<vmem>>, vector<32x128xbf16>
    %cst = arith.constant dense<0.000000e+00> : vector<16x128xf32>
    %3 = tpu.matmul %1, %2, %cst {dimension_numbers = #tpu.dot_dimension_numbers<[1], [0], [0], [1], [0, 0, 1, 1], [], []>} : vector<16x32xbf16>, vector<32x128xbf16>, vector<16x128xf32> -> vector<16x128xf32>
    %c0_3 = arith.constant 0 : index
    %c0_4 = arith.constant 0 : index
    %4 = vector.load %arg3[%c0_3, %c0_4] : memref<1x128xf32, #tpu.memory_space<vmem>>, vector<1x128xf32>
    %5 = vector.broadcast %4 : vector<1x128xf32> to vector<16x128xf32>
    %6 = arith.addf %3, %5 : vector<16x128xf32>
    %cst_5 = arith.constant 0.000000e+00 : f32
    %7 = vector.broadcast %cst_5 : f32 to vector<16x128xf32>
    %8 = arith.maximumf %6, %7 : vector<16x128xf32>
    %9 = arith.truncf %8 : vector<16x128xf32> to vector<16x128xbf16>
    %c0_6 = arith.constant 0 : index
    %c0_7 = arith.constant 0 : index
    %10 = vector.load %arg4[%c0_6, %c0_7] : memref<128x128xbf16, #tpu.memory_space<vmem>>, vector<128x128xbf16>
    %cst_8 = arith.constant dense<0.000000e+00> : vector<16x128xf32>
    %11 = tpu.matmul %9, %10, %cst_8 {dimension_numbers = #tpu.dot_dimension_numbers<[1], [0], [0], [1], [0, 0, 1, 1], [], []>} : vector<16x128xbf16>, vector<128x128xbf16>, vector<16x128xf32> -> vector<16x128xf32>
    %c0_9 = arith.constant 0 : index
    %c0_10 = arith.constant 0 : index
    %12 = vector.load %arg5[%c0_9, %c0_10] : memref<1x128xf32, #tpu.memory_space<vmem>>, vector<1x128xf32>
    %13 = vector.broadcast %12 : vector<1x128xf32> to vector<16x128xf32>
    %14 = arith.addf %11, %13 : vector<16x128xf32>
    %15 = arith.truncf %14 : vector<16x128xf32> to vector<16x128xbf16>
    %c0_11 = arith.constant 0 : index
    %c0_12 = arith.constant 0 : index
    %16 = vector.load %arg6[%c0_11, %c0_12] : memref<16x128xbf16, #tpu.memory_space<vmem>>, vector<16x128xbf16>
    tpu.vector_store %arg6[%c0_11, %c0_12], %15 {strides = array<i32>} : memref<16x128xbf16, #tpu.memory_space<vmem>>, vector<16x128xbf16>,
    return
  }
  func.func @transform_0(%arg0: i32) -> (i32, i32) {
    %c0_i32 = arith.constant 0 : i32
    %c0_i32_0 = arith.constant 0 : i32
    return %arg0, %c0_i32 : i32, i32
  }
  func.func @transform_1(%arg0: i32) -> (i32, i32) {
    %c0_i32 = arith.constant 0 : i32
    %c0_i32_0 = arith.constant 0 : i32
    %c0_i32_1 = arith.constant 0 : i32
    return %c0_i32, %c0_i32_0 : i32, i32
  }
  func.func @transform_2(%arg0: i32) -> (i32, i32) {
    %c0_i32 = arith.constant 0 : i32
    %c0_i32_0 = arith.constant 0 : i32
    %c0_i32_1 = arith.constant 0 : i32
    return %c0_i32, %c0_i32_0 : i32, i32
  }
  func.func @transform_3(%arg0: i32) -> (i32, i32) {
    %c0_i32 = arith.constant 0 : i32
    %c0_i32_0 = arith.constant 0 : i32
    %c0_i32_1 = arith.constant 0 : i32
    return %c0_i32, %c0_i32_0 : i32, i32
  }
  func.func @transform_4(%arg0: i32) -> (i32, i32) {
    %c0_i32 = arith.constant 0 : i32
    %c0_i32_0 = arith.constant 0 : i32
    %c0_i32_1 = arith.constant 0 : i32
    return %c0_i32, %c0_i32_0 : i32, i32
  }
  func.func @transform_5(%arg0: i32) -> (i32, i32) {
    %c0_i32 = arith.constant 0 : i32
    %c0_i32_0 = arith.constant 0 : i32
    return %arg0, %c0_i32 : i32, i32
  }
}

</mosaic_0001>

<llo_original>
// kernel: simple_nn_forward.1
$region0: #{simple_nn_forward.1}
  #allocation0 [shape = 'u32[]', space=smem, size = 0x4, offset = 0x4, fixed_abs, tag = 'smem constant byte address 0x4 - core index']
  #allocation1 [shape = 'u32[144,128]{1,0:T(1,128)}', space=vmem, size = 0x12000, scoped, tag = 'internal scratch']
  %s0 = inlined_call_operand.vmem [shape: f32[16,32], index: 0, kind: input, shape index: {}]
  %s1 = inlined_call_operand.vmem [shape: bf16[32,128], index: 1, kind: input, shape index: {}]
  %s2 = inlined_call_operand.vmem [shape: f32[1,128], index: 2, kind: input, shape index: {}]
  %s3 = inlined_call_operand.vmem [shape: bf16[128,128], index: 3, kind: input, shape index: {}]
  %s4 = inlined_call_operand.vmem [shape: f32[1,128], index: 4, kind: input, shape index: {}]
  %s5 = inlined_call_operand.vmem [shape: bf16[16,128], index: 5, kind: output, shape index: {}]
  %s6 = sld [smem:[#allocation0]]
  $region30: #{simple_nn_forward.1} parent=0
    _
  %s8 = ssub.s32 1, %s6
  %s9 = scalar_select 0, %s8, %s6
  // Predicated region
  $region2: #{simple_nn_forward.1} parent=0 // pred_check
    _
  $region3: #{simple_nn_forward.1} parent=0 // pred_check_branch
    %11 = sbr.rel (0) target = $region5
  $region4: #{simple_nn_forward.1} parent=0 // pred_region
    _
  $region5: #{simple_nn_forward.1} parent=0 // pred_fallthru
    _
  // Predicated region
  $region6: #{simple_nn_forward.1} parent=0 // pred_check
    _
  $region7: #{simple_nn_forward.1} parent=0 // pred_check_branch
    %13 = sbr.rel (0) target = $region9
  $region8: #{simple_nn_forward.1} parent=0 // pred_region
    _
  $region9: #{simple_nn_forward.1} parent=0 // pred_fallthru
    _
  // Predicated region
  $region10: #{simple_nn_forward.1} parent=0 // pred_check
    _
  $region11: #{simple_nn_forward.1} parent=0 // pred_check_branch
    %15 = sbr.rel (0) target = $region13
  $region12: #{simple_nn_forward.1} parent=0 // pred_region
    _
  $region13: #{simple_nn_forward.1} parent=0 // pred_fallthru
    _
  // Predicated region
  $region14: #{simple_nn_forward.1} parent=0 // pred_check
    _
  $region15: #{simple_nn_forward.1} parent=0 // pred_check_branch
    %17 = sbr.rel (0) target = $region17
  $region16: #{simple_nn_forward.1} parent=0 // pred_region
    _
  $region17: #{simple_nn_forward.1} parent=0 // pred_fallthru
    _
  // Predicated region
  $region18: #{simple_nn_forward.1} parent=0 // pred_check
    _
  $region19: #{simple_nn_forward.1} parent=0 // pred_check_branch
    %19 = sbr.rel (0) target = $region21
  $region20: #{simple_nn_forward.1} parent=0 // pred_region
    _
  $region21: #{simple_nn_forward.1} parent=0 // pred_fallthru
    _
  %v21 = vld [vmem:[%s0] sm:$0xff]
  %v22 = vld [vmem:[%s0 + $0x8] sm:$0xff]
  %v23 = vpack.c.bf16 %v22, %v21
  %v24 = vld [vmem:[%s1] sm:$0xf]
  %v25 = vld [vmem:[%s1 + $0x4] sm:$0xf]
  %v26 = vld [vmem:[%s1 + $0x8] sm:$0xf]
  %v27 = vld [vmem:[%s1 + $0xc] sm:$0xf]
  %v28 = vld [vmem:[%s2] sm:$0x1]
  %v30 = vlaneseq
  %v31 = vshrl.u32 %v30, 7
  %v32 = vsub.s32 0, %v31
  %v33 = vrot.slane %v28, %v32
  %v39 = vunpack.c.l.b16 %v24
  %v40 = vunpack.c.l.b16 %v25
  %v41 = vunpack.c.l.b16 %v26
  %v42 = vunpack.c.l.b16 %v27
  %v43 = vpack.c.b16 %v40, %v39
  %v44 = vpack.c.b16 %v42, %v41
  %vm47 = vcmask 261120
  %v49 = vsel %vm47, %v23, 0
  %51 = vmatprep.subr.bf16.mxu0 0
  %52 = vmatpush1.bf16.msra.mxu0 0
  %53 = vmatprep.subr.bf16.mxu0 0
  %54 = vmatpush1.bf16.msra.mxu0 0
  %55 = vmatprep.subr.bf16.mxu0 0
  %56 = vmatpush1.bf16.msra.mxu0 0
  %57 = vmatprep.subr.bf16.mxu0 0
  %58 = vmatpush1.bf16.msra.mxu0 0
  %59 = vmatprep.subr.bf16.mxu0 0
  %60 = vmatpush1.bf16.msra.mxu0 0
  %61 = vmatprep.subr.bf16.mxu0 0
  %62 = vmatpush1.bf16.msra.mxu0 0
  %63 = vmatprep.subr.bf16.mxu0 0
  %64 = vmatpush1.bf16.msra.mxu0 %v44
  %65 = vmatprep.subr.bf16.mxu0 0
  %66 = vmatpush1.bf16.msra.mxu0 %v43
  %67 = vmatprep.subr.bf16.mxu0 0
  %68 = vmatpush2.bf16.msra.mxu0 0
  %69 = vmatprep.subr.bf16.mxu0 0
  %70 = vmatpush2.bf16.msra.mxu0 0
  %71 = vmatprep.subr.bf16.mxu0 0
  %72 = vmatpush2.bf16.msra.mxu0 0
  %73 = vmatprep.subr.bf16.mxu0 0
  %74 = vmatpush2.bf16.msra.mxu0 0
  %75 = vmatprep.subr.bf16.mxu0 0
  %76 = vmatpush2.bf16.msra.mxu0 0
  %77 = vmatprep.subr.bf16.mxu0 0
  %78 = vmatpush2.bf16.msra.mxu0 0
  %79 = vmatprep.subr.bf16.mxu0 0
  %80 = vmatpush2.bf16.msra.mxu0 0
  %81 = vmatprep.subr.bf16.mxu0 0
  %82 = vmatpush2.bf16.msra.mxu0 0
  %83 = vmatprep.mubr.bf16.mxu0 0
  %84 = vmatmul.mubr.bf16.gmra.mxu0 %v49
  %v85 = vpop.f32.mrf.mxu0
  %v86 = vadd.f32 %v33, %v85
  %v87 = vpop.f32.mrf.mxu0
  %v88 = vpop.f32.mrf.mxu0
  %v89 = vadd.f32 %v33, %v88
  %v90 = vpop.f32.mrf.mxu0
  %91 = vdwg.mxu0
  %v92 = vmax.f32 %v86, 0.0
  %v93 = vmax.f32 %v89, 0.0
  %v94 = vpack.c.bf16 %v93, %v92
  %v95 = vld [vmem:[%s3] sm:$0xf]
  %v96 = vld [vmem:[%s3 + $0x4] sm:$0xf]
  %v97 = vld [vmem:[%s3 + $0x8] sm:$0xf]
  %v98 = vld [vmem:[%s3 + $0xc] sm:$0xf]
  %v99 = vld [vmem:[%s3 + $0x10] sm:$0xf]
  %v100 = vld [vmem:[%s3 + $0x14] sm:$0xf]
  %v101 = vld [vmem:[%s3 + $0x18] sm:$0xf]
  %v102 = vld [vmem:[%s3 + $0x1c] sm:$0xf]
  %v103 = vld [vmem:[%s3 + $0x20] sm:$0xf]
  %v104 = vld [vmem:[%s3 + $0x24] sm:$0xf]
  %v105 = vld [vmem:[%s3 + $0x28] sm:$0xf]
  %v106 = vld [vmem:[%s3 + $0x2c] sm:$0xf]
  %v107 = vld [vmem:[%s3 + $0x30] sm:$0xf]
  %v108 = vld [vmem:[%s3 + $0x34] sm:$0xf]
  %v109 = vld [vmem:[%s3 + $0x38] sm:$0xf]
  %v110 = vld [vmem:[%s3 + $0x3c] sm:$0xf]
  %v111 = vld [vmem:[%s4] sm:$0x1]
  %v113 = vlaneseq
  %v114 = vshrl.u32 %v113, 7
  %v115 = vsub.s32 0, %v114
  %v116 = vrot.slane %v111, %v115
  %v134 = vunpack.c.l.b16 %v95
  %v135 = vunpack.c.l.b16 %v96
  %v136 = vunpack.c.l.b16 %v97
  %v137 = vunpack.c.l.b16 %v98
  %v138 = vunpack.c.l.b16 %v99
  %v139 = vunpack.c.l.b16 %v100
  %v140 = vunpack.c.l.b16 %v101
  %v141 = vunpack.c.l.b16 %v102
  %v142 = vunpack.c.l.b16 %v103
  %v143 = vunpack.c.l.b16 %v104
  %v144 = vunpack.c.l.b16 %v105
  %v145 = vunpack.c.l.b16 %v106
  %v146 = vunpack.c.l.b16 %v107
  %v147 = vunpack.c.l.b16 %v108
  %v148 = vunpack.c.l.b16 %v109
  %v149 = vunpack.c.l.b16 %v110
  %v150 = vpack.c.b16 %v135, %v134
  %v151 = vpack.c.b16 %v137, %v136
  %v152 = vpack.c.b16 %v139, %v138
  %v153 = vpack.c.b16 %v141, %v140
  %v154 = vpack.c.b16 %v143, %v142
  %v155 = vpack.c.b16 %v145, %v144
  %v156 = vpack.c.b16 %v147, %v146
  %v157 = vpack.c.b16 %v149, %v148
  %166 = vmatprep.subr.bf16.mxu0 0
  %167 = vmatpush1.bf16.msra.mxu0 %v157
  %168 = vmatprep.subr.bf16.mxu0 0
  %169 = vmatpush1.bf16.msra.mxu0 %v156
  %170 = vmatprep.subr.bf16.mxu0 0
  %171 = vmatpush1.bf16.msra.mxu0 %v155
  %172 = vmatprep.subr.bf16.mxu0 0
  %173 = vmatpush1.bf16.msra.mxu0 %v154
  %174 = vmatprep.subr.bf16.mxu0 0
  %175 = vmatpush1.bf16.msra.mxu0 %v153
  %176 = vmatprep.subr.bf16.mxu0 0
  %177 = vmatpush1.bf16.msra.mxu0 %v152
  %178 = vmatprep.subr.bf16.mxu0 0
  %179 = vmatpush1.bf16.msra.mxu0 %v151
  %180 = vmatprep.subr.bf16.mxu0 0
  %181 = vmatpush1.bf16.msra.mxu0 %v150
  %182 = vmatprep.subr.bf16.mxu0 0
  %183 = vmatpush2.bf16.msra.mxu0 0
  %184 = vmatprep.subr.bf16.mxu0 0
  %185 = vmatpush2.bf16.msra.mxu0 0
  %186 = vmatprep.subr.bf16.mxu0 0
  %187 = vmatpush2.bf16.msra.mxu0 0
  %188 = vmatprep.subr.bf16.mxu0 0
  %189 = vmatpush2.bf16.msra.mxu0 0
  %190 = vmatprep.subr.bf16.mxu0 0
  %191 = vmatpush2.bf16.msra.mxu0 0
  %192 = vmatprep.subr.bf16.mxu0 0
  %193 = vmatpush2.bf16.msra.mxu0 0
  %194 = vmatprep.subr.bf16.mxu0 0
  %195 = vmatpush2.bf16.msra.mxu0 0
  %196 = vmatprep.subr.bf16.mxu0 0
  %197 = vmatpush2.bf16.msra.mxu0 0
  %198 = vmatprep.mubr.bf16.mxu0 0
  %199 = vmatmul.mubr.bf16.gmra.mxu0 %v94
  %v200 = vpop.f32.mrf.mxu0
  %v201 = vadd.f32 %v116, %v200
  %v202 = vpop.f32.mrf.mxu0
  %v203 = vpop.f32.mrf.mxu0
  %v204 = vadd.f32 %v116, %v203
  %v205 = vpop.f32.mrf.mxu0
  %206 = vdwg.mxu0
  %v207 = vpack.c.bf16 %v204, %v201
  %v209 = vunpack.c.l.b16 %v207
  %v210 = vunpack.c.h.b16 %v207
  %v211 = vpack.c.b16 %v209, %v209
  %v212 = vpack.c.b16 %v210, %v210
  %215 = vst [vmem:[%s5] sm:$0xf] %v211
  %216 = vst [vmem:[%s5 + $0x4] sm:$0xf] %v212
  // Predicated region
  $region22: #{simple_nn_forward.1} parent=0 // pred_check
    _
  $region23: #{simple_nn_forward.1} parent=0 // pred_check_branch
    %218 = sbr.rel (0) target = $region25
  $region24: #{simple_nn_forward.1} parent=0 // pred_region
    _
  $region25: #{simple_nn_forward.1} parent=0 // pred_fallthru
    _
  // Predicated region
  $region26: #{simple_nn_forward.1} parent=0 // pred_check
    _
  $region27: #{simple_nn_forward.1} parent=0 // pred_check_branch
    %220 = sbr.rel (0) target = $region29
  $region28: #{simple_nn_forward.1} parent=0 // pred_region
    _
  $region29: #{simple_nn_forward.1} parent=0 // pred_fallthru
    _

</llo_original>
